<compile_context>
chip_gen: v7x
topology: tpu7x:2x2x1
jax: 0.10.0
libtpu: 0.0.40
codegen_flags: <defaults>
</compile_context>

<pallas_src>
import functools

import jax
import jax.numpy as jnp
from jax import lax
from jax.experimental import pallas as pl
from jax.experimental.pallas import tpu as pltpu

IGNORE_INDEX = 255.0
LANES = 128
SUBLANES = 8
MAX_BLOCK_ROWS = 2048  # (2048,128) f32 = 1 MiB/input; 3 inputs x 2 bufs = 6 MiB VMEM


def _reg_l1_kernel(o_ref, t_ref, m_ref, num_ref, den_ref, *,
                   block_rows, total_rows, ragged):
    o = o_ref[...].astype(jnp.float32)
    t = t_ref[...].astype(jnp.float32)
    m = m_ref[...].astype(jnp.float32)

    # ignore_index remap: mask==255 -> 0
    m = jnp.where(m == jnp.float32(IGNORE_INDEX), jnp.float32(0.0), m)

    # |out*m - tgt*m| == |(out - tgt) * m|  (one fewer vmul per vreg)
    diff = jnp.abs((o - t) * m)

    if ragged:
        # Mask rows that fall past the real array (partial last block reads
        # unspecified data); select-0 also kills any NaN garbage.
        row0 = pl.program_id(0) * block_rows
        gid = row0 + lax.broadcasted_iota(jnp.int32, (block_rows, LANES), 0)
        valid = gid < total_rows
        diff = jnp.where(valid, diff, jnp.float32(0.0))
        m = jnp.where(valid, m, jnp.float32(0.0))

    # Vreg-shaped partial sums: reduce groups of 8-sublane vregs elementwise
    # (VPU adds), leaving the single cross-lane reduce to the wrapper.
    num_ref[...] = jnp.sum(diff.reshape(block_rows // SUBLANES, SUBLANES, LANES), axis=0)
    den_ref[...] = jnp.sum(m.reshape(block_rows // SUBLANES, SUBLANES, LANES), axis=0)


def _flatten_lane_dense(x):
    """Flatten to [rows, 128]. Zero-copy reshape unless numel % 128 != 0."""
    flat = x.reshape(-1)
    pad = (-flat.shape[0]) % LANES
    if pad:
        # Only triggered for odd element counts; zero pad contributes nothing
        # (mask pad = 0). Row raggedness is handled in-kernel, not here.
        flat = jnp.pad(flat, (0, pad))
    return flat.reshape(-1, LANES)


def reg_l1_loss(output, target, mask, *, max_block_rows=MAX_BLOCK_ROWS):
    assert output.shape == target.shape == mask.shape

    o2 = _flatten_lane_dense(output)
    t2 = _flatten_lane_dense(target)
    m2 = _flatten_lane_dense(mask)
    rows = o2.shape[0]

    # Block rows: as large as possible, multiple of 8, capped for VMEM budget
    # (3 inputs x 2 buffers x block must stay inside scoped VMEM on v5e/v7x).
    tm = min(int(max_block_rows), pl.cdiv(rows, SUBLANES) * SUBLANES)
    grid_n = pl.cdiv(rows, tm)
    ragged = (rows % tm) != 0

    kernel = functools.partial(
        _reg_l1_kernel, block_rows=tm, total_rows=rows, ragged=ragged)

    in_spec = pl.BlockSpec((tm, LANES), lambda i: (i, 0))
    out_spec = pl.BlockSpec((SUBLANES, LANES), lambda i: (i, 0))
    part_shape = jax.ShapeDtypeStruct((grid_n * SUBLANES, LANES), jnp.float32)

    num_part, den_part = pl.pallas_call(
        kernel,
        out_shape=(part_shape, part_shape),
        grid_spec=pltpu.PrefetchScalarGridSpec(
            num_scalar_prefetch=0,
            grid=(grid_n,),
            in_specs=[in_spec, in_spec, in_spec],
            out_specs=(out_spec, out_spec),
        ),
        compiler_params=pltpu.CompilerParams(
            # No carried state -> row-block axis is independent; lets v7x
            # megacore shard it, no-op on single-TC v5e/v6e.
            dimension_semantics=("parallel",),
        ),
    )(o2, t2, m2)

    num = jnp.sum(num_part)
    den = jnp.sum(den_part)
    return num / (den + jnp.float32(1e-12))


def reg_l1_loss_ref(output, target, mask):
    m = jnp.where(mask == IGNORE_INDEX, 0.0, mask).astype(jnp.float32)
    o = output.astype(jnp.float32)
    t = target.astype(jnp.float32)
    num = jnp.sum(jnp.abs(o * m - t * m))
    return num / (jnp.sum(m) + 1e-12)


def _make_inputs(key, shape):
    k1, k2, k3 = jax.random.split(key, 3)
    output = jax.random.normal(k1, shape, dtype=jnp.float32)
    target = jax.random.normal(k2, shape, dtype=jnp.float32)
    u = jax.random.uniform(k3, shape)
    mask = jnp.where(u < 0.5, 1.0, 0.0)
    mask = jnp.where(u > 0.9, jnp.float32(IGNORE_INDEX), mask).astype(jnp.float32)
    return output, target, mask


if __name__ == "__main__":
    key = jax.random.PRNGKey(0)
    k_a, k_b, k_c = jax.random.split(key, 3)

    # Primary small-shape test (NCHW).
    out_a, tgt_a, msk_a = _make_inputs(k_a, (2, 4, 16, 16))
    loss_a = jax.block_until_ready(reg_l1_loss(out_a, tgt_a, msk_a))
    ref_a = jax.block_until_ready(reg_l1_loss_ref(out_a, tgt_a, msk_a))
    assert jnp.allclose(loss_a, ref_a, rtol=1e-5, atol=1e-6), (loss_a, ref_a)

    # Exercise the multi-block + ragged-tail path (rows=18 with 8-row blocks).
    out_b, tgt_b, msk_b = _make_inputs(k_b, (2, 4, 16, 18))
    loss_b = jax.block_until_ready(
        reg_l1_loss(out_b, tgt_b, msk_b, max_block_rows=8))
    ref_b = jax.block_until_ready(reg_l1_loss_ref(out_b, tgt_b, msk_b))
    assert jnp.allclose(loss_b, ref_b, rtol=1e-5, atol=1e-6), (loss_b, ref_b)

    # Exercise the numel % 128 != 0 path (minimal lane pad).
    out_c, tgt_c, msk_c = _make_inputs(k_c, (2, 3, 5, 7))
    loss_c = jax.block_until_ready(reg_l1_loss(out_c, tgt_c, msk_c))
    ref_c = jax.block_until_ready(reg_l1_loss_ref(out_c, tgt_c, msk_c))
    assert jnp.allclose(loss_c, ref_c, rtol=1e-5, atol=1e-6), (loss_c, ref_c)

    print("KERNEL_OK")
</pallas_src>

<mosaic_0001>
module attributes {stable_mosaic.version = 11 : i64} {
  func.func @_reg_l1_kernel(%arg0: i32, %arg1: memref<16x128xf32, #tpu.memory_space<vmem>>, %arg2: memref<16x128xf32, #tpu.memory_space<vmem>>, %arg3: memref<16x128xf32, #tpu.memory_space<vmem>>, %arg4: memref<8x128xf32, #tpu.memory_space<vmem>>, %arg5: memref<8x128xf32, #tpu.memory_space<vmem>>) attributes {dimension_semantics = [#tpu.dimension_semantics<parallel>], iteration_bounds = array<i64: 1>, scalar_prefetch = 0 : i64, scratch_operands = 0 : i64, tpu.core_type = #tpu.core_type<tc>, window_params = [{transform_indices = @transform_0, window_bounds = array<i64: 16, 128>}, {transform_indices = @transform_1, window_bounds = array<i64: 16, 128>}, {transform_indices = @transform_2, window_bounds = array<i64: 16, 128>}, {transform_indices = @transform_3, window_bounds = array<i64: 8, 128>}, {transform_indices = @transform_4, window_bounds = array<i64: 8, 128>}]} {
    %c0 = arith.constant 0 : index
    %c0_0 = arith.constant 0 : index
    %0 = vector.load %arg1[%c0, %c0_0] : memref<16x128xf32, #tpu.memory_space<vmem>>, vector<16x128xf32>
    %c0_1 = arith.constant 0 : index
    %c0_2 = arith.constant 0 : index
    %1 = vector.load %arg2[%c0_1, %c0_2] : memref<16x128xf32, #tpu.memory_space<vmem>>, vector<16x128xf32>
    %c0_3 = arith.constant 0 : index
    %c0_4 = arith.constant 0 : index
    %2 = vector.load %arg3[%c0_3, %c0_4] : memref<16x128xf32, #tpu.memory_space<vmem>>, vector<16x128xf32>
    %cst = arith.constant 2.550000e+02 : f32
    %3 = vector.broadcast %cst : f32 to vector<16x128xf32>
    %4 = arith.cmpf oeq, %2, %3 : vector<16x128xf32>
    %cst_5 = arith.constant 0.000000e+00 : f32
    %5 = vector.broadcast %cst_5 : f32 to vector<16x128xf32>
    %6 = arith.select %4, %5, %2 : vector<16x128xi1>, vector<16x128xf32>
    %7 = arith.subf %0, %1 : vector<16x128xf32>
    %8 = arith.mulf %7, %6 : vector<16x128xf32>
    %9 = math.absf %8 : vector<16x128xf32>
    %10 = vector.shape_cast %9 : vector<16x128xf32> to vector<2x8x128xf32>
    %cst_6 = arith.constant dense<0.000000e+00> : vector<8x128xf32>
    %11 = vector.multi_reduction <add>, %10, %cst_6 [0] : vector<2x8x128xf32> to vector<8x128xf32>
    %c0_7 = arith.constant 0 : index
    %c0_8 = arith.constant 0 : index
    %12 = vector.load %arg4[%c0_7, %c0_8] : memref<8x128xf32, #tpu.memory_space<vmem>>, vector<8x128xf32>
    tpu.vector_store %arg4[%c0_7, %c0_8], %11 {strides = array<i32>} : memref<8x128xf32, #tpu.memory_space<vmem>>, vector<8x128xf32>,
    %13 = vector.shape_cast %6 : vector<16x128xf32> to vector<2x8x128xf32>
    %cst_9 = arith.constant dense<0.000000e+00> : vector<8x128xf32>
    %14 = vector.multi_reduction <add>, %13, %cst_9 [0] : vector<2x8x128xf32> to vector<8x128xf32>
    %c0_10 = arith.constant 0 : index
    %c0_11 = arith.constant 0 : index
    %15 = vector.load %arg5[%c0_10, %c0_11] : memref<8x128xf32, #tpu.memory_space<vmem>>, vector<8x128xf32>
    tpu.vector_store %arg5[%c0_10, %c0_11], %14 {strides = array<i32>} : memref<8x128xf32, #tpu.memory_space<vmem>>, vector<8x128xf32>,
    return
  }
  func.func @transform_0(%arg0: i32) -> (i32, i32) {
    %c0_i32 = arith.constant 0 : i32
    %c0_i32_0 = arith.constant 0 : i32
    return %arg0, %c0_i32 : i32, i32
  }
  func.func @transform_1(%arg0: i32) -> (i32, i32) {
    %c0_i32 = arith.constant 0 : i32
    %c0_i32_0 = arith.constant 0 : i32
    return %arg0, %c0_i32 : i32, i32
  }
  func.func @transform_2(%arg0: i32) -> (i32, i32) {
    %c0_i32 = arith.constant 0 : i32
    %c0_i32_0 = arith.constant 0 : i32
    return %arg0, %c0_i32 : i32, i32
  }
  func.func @transform_3(%arg0: i32) -> (i32, i32) {
    %c0_i32 = arith.constant 0 : i32
    %c0_i32_0 = arith.constant 0 : i32
    return %arg0, %c0_i32 : i32, i32
  }
  func.func @transform_4(%arg0: i32) -> (i32, i32) {
    %c0_i32 = arith.constant 0 : i32
    %c0_i32_0 = arith.constant 0 : i32
    return %arg0, %c0_i32 : i32, i32
  }
}

</mosaic_0001>

<llo_original>
// kernel: tpu_custom_call.1
$region0: #{tpu_custom_call.1}
  #allocation0 [shape = 'u32[]', space=smem, size = 0x4, offset = 0x4, fixed_abs, tag = 'smem constant byte address 0x4 - core index']
  #allocation1 [shape = 'u32[144,128]{1,0:T(1,128)}', space=vmem, size = 0x12000, scoped, tag = 'internal scratch']
  %s0 = inlined_call_operand.hbm [shape: f32[16,128], index: 0, kind: input, shape index: {}]
  %s1 = inlined_call_operand.hbm [shape: f32[16,128], index: 1, kind: input, shape index: {}]
  %s2 = inlined_call_operand.hbm [shape: f32[16,128], index: 2, kind: input, shape index: {}]
  %s3 = inlined_call_operand.hbm [shape: f32[8,128], index: 3, kind: output, shape index: {0}]
  %s4 = inlined_call_operand.hbm [shape: f32[8,128], index: 4, kind: output, shape index: {1}]
  %5 = xla_tuple %s3, %s4
  %s6 = sld [smem:[#allocation0]]
  $region42: #{tpu_custom_call.1} parent=0
    _
  %s8 = ssub.s32 1, %s6
  %s9 = scalar_select 0, %s8, %s6
  $region1: #{tpu_custom_call.1} parent=0
    #allocation2 [shape = 'u8[8192]{0}', space=vmem, size = 0x2000, scoped, tag = 'input window, operand 0, single buffered']
    #allocation3 [shape = 's32[1]{0}', space=sflag, size = 0x4, scoped, tag = 'scoped memory for tpu_custom_call.1']
    #allocation4 [shape = 's32[1]{0}', space=sflag, size = 0x4, scoped, tag = 'scoped memory for tpu_custom_call.1']
    #allocation5 [shape = 'u8[8192]{0}', space=vmem, size = 0x2000, scoped, tag = 'input window, operand 1, single buffered']
    #allocation6 [shape = 's32[1]{0}', space=sflag, size = 0x4, scoped, tag = 'scoped memory for tpu_custom_call.1']
    #allocation7 [shape = 'u8[8192]{0}', space=vmem, size = 0x2000, scoped, tag = 'input window, operand 2, single buffered']
    #allocation8 [shape = 'u8[4096]{0}', space=vmem, size = 0x1000, scoped, tag = 'output window, operand 0, single buffered']
    #allocation9 [shape = 'u8[4096]{0}', space=vmem, size = 0x1000, scoped, tag = 'output window, operand 1, single buffered']
    #allocation10 [shape = 's32[1]{0}', space=sflag, size = 0x4, scoped, tag = 'scoped memory for tpu_custom_call.1']
    %10 = vsyncpa [#allocation3], 0
    %11 = vsyncpa [#allocation6], 0
    %12 = vsyncpa [#allocation4], 0
    %13 = vsyncpa [#allocation10], 0
    // Predicated region
    $region2: #{tpu_custom_call.1} parent=1 // pred_check
      _
    $region3: #{tpu_custom_call.1} parent=1 // pred_check_branch
      %15 = sbr.rel (0) target = $region5
    $region4: #{tpu_custom_call.1} parent=1 // pred_region
      %s17 = ssub.s32 256, 256
      %18 = vsyncadd [#allocation3], %s17
      %s19 = sshll.u32 [#allocation2], 4
      %s20 = int_to_ptr.vmem [resolvable:$true] %s19
      %25 = dma.hbm_to_vmem [thread:$0]  %s0, 256, %s20, [#allocation3], 128, 128, 8
    $region5: #{tpu_custom_call.1} parent=1 // pred_fallthru
      _
    // Predicated region
    $region6: #{tpu_custom_call.1} parent=1 // pred_check
      _
    $region7: #{tpu_custom_call.1} parent=1 // pred_check_branch
      %27 = sbr.rel (0) target = $region9
    $region8: #{tpu_custom_call.1} parent=1 // pred_region
      %s29 = ssub.s32 256, 256
      %30 = vsyncadd [#allocation6], %s29
      %s31 = sshll.u32 [#allocation5], 4
      %s32 = int_to_ptr.vmem [resolvable:$true] %s31
      %37 = dma.hbm_to_vmem [thread:$0]  %s1, 256, %s32, [#allocation6], 128, 128, 8
    $region9: #{tpu_custom_call.1} parent=1 // pred_fallthru
      _
    // Predicated region
    $region10: #{tpu_custom_call.1} parent=1 // pred_check
      _
    $region11: #{tpu_custom_call.1} parent=1 // pred_check_branch
      %39 = sbr.rel (0) target = $region13
    $region12: #{tpu_custom_call.1} parent=1 // pred_region
      %s41 = ssub.s32 256, 256
      %42 = vsyncadd [#allocation6], %s41
      %s43 = sshll.u32 [#allocation7], 4
      %s44 = int_to_ptr.vmem [resolvable:$true] %s43
      %49 = dma.hbm_to_vmem [thread:$0]  %s2, 256, %s44, [#allocation6], 128, 128, 8
    $region13: #{tpu_custom_call.1} parent=1 // pred_fallthru
      _
    // Predicated region
    $region14: #{tpu_custom_call.1} parent=1 // pred_check
      _
    $region15: #{tpu_custom_call.1} parent=1 // pred_check_branch
      %51 = sbr.rel (0) target = $region17
    $region16: #{tpu_custom_call.1} parent=1 // pred_region
      %52 = dma.done [#allocation3], 256
    $region17: #{tpu_custom_call.1} parent=1 // pred_fallthru
      _
    // Predicated region
    $region18: #{tpu_custom_call.1} parent=1 // pred_check
      _
    $region19: #{tpu_custom_call.1} parent=1 // pred_check_branch
      %54 = sbr.rel (0) target = $region21
    $region20: #{tpu_custom_call.1} parent=1 // pred_region
      %55 = dma.done [#allocation6], 256
    $region21: #{tpu_custom_call.1} parent=1 // pred_fallthru
      _
    // Predicated region
    $region22: #{tpu_custom_call.1} parent=1 // pred_check
      _
    $region23: #{tpu_custom_call.1} parent=1 // pred_check_branch
      %57 = sbr.rel (0) target = $region25
    $region24: #{tpu_custom_call.1} parent=1 // pred_region
      %58 = dma.done [#allocation6], 256
    $region25: #{tpu_custom_call.1} parent=1 // pred_fallthru
      _
    %v59 = vld [vmem:[#allocation2] sm:$0xff]
    %v60 = vld [vmem:[#allocation2 + $0x8] sm:$0xff]
    %v61 = vld [vmem:[#allocation5] sm:$0xff]
    %v62 = vld [vmem:[#allocation5 + $0x8] sm:$0xff]
    %v63 = vld [vmem:[#allocation7] sm:$0xff]
    %v64 = vld [vmem:[#allocation7 + $0x8] sm:$0xff]
    %vm65 = vcmp.eq.f32.partialorder %v63, 255.0
    %vm66 = vcmp.eq.f32.partialorder %v64, 255.0
    %v67 = vsel %vm65, 0.0, %v63
    %v68 = vsel %vm66, 0.0, %v64
    %v69 = vsub.f32 %v59, %v61
    %v70 = vsub.f32 %v60, %v62
    %v71 = vmul.f32 %v69, %v67
    %v72 = vmul.f32 %v70, %v68
    %v73 = vand.u32 2147483647, %v71
    %v74 = vand.u32 2147483647, %v72
    %v75 = vadd.f32 %v73, %v74
    %76 = vst [vmem:[#allocation8] sm:$0xff] %v75
    %v77 = vadd.f32 %v67, %v68
    %78 = vst [vmem:[#allocation9] sm:$0xff] %v77
    // Predicated region
    $region26: #{tpu_custom_call.1} parent=1 // pred_check
      _
    $region27: #{tpu_custom_call.1} parent=1 // pred_check_branch
      %80 = sbr.rel (0) target = $region29
    $region28: #{tpu_custom_call.1} parent=1 // pred_region
      %s82 = ssub.s32 128, 128
      %83 = vsyncadd [#allocation4], %s82
      %s85 = sshll.u32 [#allocation8], 4
      %s86 = int_to_ptr.vmem [resolvable:$true] %s85
      %88 = dma.vmem_to_hbm [thread:$0]  %s86, 128, %s3, [#allocation4]
    $region29: #{tpu_custom_call.1} parent=1 // pred_fallthru
      _
    // Predicated region
    $region30: #{tpu_custom_call.1} parent=1 // pred_check
      _
    $region31: #{tpu_custom_call.1} parent=1 // pred_check_branch
      %90 = sbr.rel (0) target = $region33
    $region32: #{tpu_custom_call.1} parent=1 // pred_region
      %s92 = ssub.s32 128, 128
      %93 = vsyncadd [#allocation10], %s92
      %s95 = sshll.u32 [#allocation9], 4
      %s96 = int_to_ptr.vmem [resolvable:$true] %s95
      %98 = dma.vmem_to_hbm [thread:$0]  %s96, 128, %s4, [#allocation10]
    $region33: #{tpu_custom_call.1} parent=1 // pred_fallthru
      _
    // Predicated region
    $region34: #{tpu_custom_call.1} parent=1 // pred_check
      _
    $region35: #{tpu_custom_call.1} parent=1 // pred_check_branch
      %100 = sbr.rel (0) target = $region37
    $region36: #{tpu_custom_call.1} parent=1 // pred_region
      %101 = dma.done [#allocation4], 128
    $region37: #{tpu_custom_call.1} parent=1 // pred_fallthru
      _
    // Predicated region
    $region38: #{tpu_custom_call.1} parent=1 // pred_check
      _
    $region39: #{tpu_custom_call.1} parent=1 // pred_check_branch
      %103 = sbr.rel (0) target = $region41
    $region40: #{tpu_custom_call.1} parent=1 // pred_region
      %104 = dma.done [#allocation10], 128
    $region41: #{tpu_custom_call.1} parent=1 // pred_fallthru
      _
    %105 = vsyncpa [#allocation3], 1
    %106 = vsyncpa [#allocation6], 1
    %107 = vsyncpa [#allocation4], 1
    %108 = vsyncpa [#allocation10], 1

</llo_original>
